<compile_context>
chip_gen: v7x
topology: tpu7x:2x2x1
jax: 0.10.0
libtpu: 0.0.40
codegen_flags: <defaults>
</compile_context>

<pallas_src>
import functools

import jax
import jax.numpy as jnp
from jax.experimental import pallas as pl
from jax.experimental.pallas import tpu as pltpu

# ---------------- model hyperparameters (small, consistent with the module) --
VOCAB_SIZE = 50
EMBED_DIM = 32
MAX_SEQ_LEN = 16
CONV_K = 5
CONV_OUT = 128
HIDDEN = 128
BATCH = 2

_INVALID_CODE = 1 << 20      # never matches a one-hot column (columns < 256)


def _fake_news_kernel(win_ref, tw_ref, w1_ref, b1_ref, w2_ref, b2_ref, out_ref,
                      *, batch, l_pad, vocab, conv_k):
    """Entire forward (post token-windowing) in one kernel; all VMEM resident.

    win_ref : (B*Lpad, K+1) int32  window token codes; col K selects the bias
              row (0 for valid rows); invalid rows hold _INVALID_CODE.
    tw_ref  : (KVpad, Cout)  bf16  folded embedding (x) conv1d weight + bias row
    w1_ref  : (Cout, H)      bf16  dense1 weight (in x out)
    b1_ref  : (1, H)         f32   dense1 bias
    w2_ref  : (1, H)         f32   dense2 weight as a row
    b2_ref  : (1,)           f32   dense2 bias (SMEM scalar)
    out_ref : (B, 1)         f32   logits
    """
    m = batch * l_pad
    kv_pad = tw_ref.shape[0]
    c_out = tw_ref.shape[1]

    # --- one-hot encode the window codes (pure VPU: iota + compare + add) ---
    codes = win_ref[...]                                       # (m, K+1) int32
    col = jax.lax.broadcasted_iota(jnp.int32, (m, kv_pad), 1)  # (m, KVpad)
    onehot = jnp.zeros((m, kv_pad), jnp.float32)
    for k in range(conv_k + 1):                                # static, K+1=6
        code_k = codes[:, k:k + 1] + k * vocab                 # (m, 1) int32
        onehot = onehot + jnp.where(col == code_k, 1.0, 0.0)

    # --- Embedding lookup + Conv1d(k=5) + conv bias as ONE MXU matmul -------
    # bf16 operands, f32 accumulation.  Padded window rows select nothing and
    # are exactly 0; with ReLU (>=0) they never win the max-pool below.
    conv = jnp.dot(onehot.astype(tw_ref.dtype), tw_ref[...],
                   preferred_element_type=jnp.float32)         # (m, Cout) f32
    conv = jnp.maximum(conv, 0.0)                              # ReLU, f32

    # --- global max-pool: static sublane-aligned per-batch slices -----------
    row = jax.lax.broadcasted_iota(jnp.int32, (batch, c_out), 0)
    pooled = jnp.zeros((batch, c_out), jnp.float32)
    for b in range(batch):                                     # static, B=2
        pmax = jnp.max(conv[b * l_pad:(b + 1) * l_pad, :], axis=0,
                       keepdims=True)                          # (1, Cout)
        pooled = jnp.where(row == b, pmax, pooled)             # (B, Cout) f32

    # --- dense1 + ReLU (bf16 MXU operands, f32 accumulation / elementwise) --
    h = jnp.dot(pooled.astype(w1_ref.dtype), w1_ref[...],
                preferred_element_type=jnp.float32)
    h = jnp.maximum(h + b1_ref[...], 0.0)                      # (B, H) f32

    # Dropout(0.5): identity in inference/eval mode.

    # --- dense2 (N=1): VPU multiply + lane reduce, skip the MXU -------------
    out = jnp.sum(h * w2_ref[...], axis=-1, keepdims=True) + b2_ref[0]
    out_ref[...] = out.astype(out_ref.dtype)                   # (B, 1)


def _window_codes(tokens, l_pad, l_out):
    """(B*Lpad, K+1) int32 window codes — pad/slice/stack only, no gather."""
    B, L = tokens.shape
    tok_pad = jnp.pad(tokens, ((0, 0), (0, l_pad + CONV_K - 1 - L)))
    cols = [tok_pad[:, k:k + l_pad] for k in range(CONV_K)]     # each (B, Lpad)
    cols.append(jnp.zeros((B, l_pad), jnp.int32))               # bias selector
    win = jnp.stack(cols, axis=-1)                              # (B, Lpad, K+1)
    invalid = (jnp.arange(l_pad) >= l_out)[None, :, None]
    win = jnp.where(invalid, jnp.int32(_INVALID_CODE), win)
    return win.reshape(B * l_pad, CONV_K + 1)


def fake_news_detector_forward(tokens, prep):
    """tokens: (B, L) int32; prep: prepare_params() output. Returns (B,1) f32."""
    B, L = tokens.shape
    l_out = L - CONV_K + 1                     # 12
    l_pad = ((l_out + 7) // 8) * 8             # 16 (sublane-aligned)

    win = _window_codes(tokens, l_pad, l_out)  # (B*Lpad, K+1) int32, ~0.8 KB

    kernel = functools.partial(_fake_news_kernel, batch=B, l_pad=l_pad,
                               vocab=VOCAB_SIZE, conv_k=CONV_K)
    vmem = pl.BlockSpec(memory_space=pltpu.MemorySpace.VMEM)
    smem = pl.BlockSpec(memory_space=pltpu.MemorySpace.SMEM)

    return pl.pallas_call(
        kernel,
        out_shape=jax.ShapeDtypeStruct((B, 1), jnp.float32),
        in_specs=[vmem, vmem, vmem, vmem, vmem, smem],
        out_specs=vmem,
    )(win, prep['tw'], prep['w1'], prep['b1'], prep['w2_row'], prep['b2'])


def prepare_params(params):
    """One-time weight preprocessing (hoisted out of the forward path)."""
    emb = params['embedding']                                  # (V, E) f32
    cw = params['conv_w']                                      # (K, E, Cout)
    V = emb.shape[0]
    kv = CONV_K * V + 1                                        # + bias row
    kv_pad = ((kv + 127) // 128) * 128                         # 256 (lane-aligned)
    # tw[k*V + v, c] = embedding[v] @ conv_w[k]  (exact f32 fold)
    tw = jnp.einsum('ve,kec->kvc', emb, cw).reshape(CONV_K * V, CONV_OUT)
    tw_full = jnp.zeros((kv_pad, CONV_OUT), jnp.float32)
    tw_full = tw_full.at[:CONV_K * V].set(tw)
    tw_full = tw_full.at[CONV_K * V].set(params['conv_b'][0])  # bias row (250)
    return dict(tw=tw_full.astype(jnp.bfloat16),               # bf16 MXU operand
                w1=params['w1'].astype(jnp.bfloat16),           # bf16 MXU operand
                b1=params['b1'],                                # f32
                w2_row=params['w2'].T,                          # (1, H) f32
                b2=params['b2'].reshape(1))                     # (1,) f32 (SMEM)


def init_params(key):
    """Deterministic parameter init matching the module's shapes."""
    ks = jax.random.split(key, 7)
    emb = jax.random.normal(ks[0], (VOCAB_SIZE, EMBED_DIM), jnp.float32) * 0.1
    emb = emb.at[0].set(0.0)                                   # padding_idx=0
    # torch Conv1d weight is (Cout, E, K); we store it as (K, E, Cout).
    conv_w = jax.random.normal(ks[1], (CONV_K, EMBED_DIM, CONV_OUT),
                               jnp.float32) * 0.05
    conv_b = jax.random.normal(ks[2], (1, CONV_OUT), jnp.float32) * 0.05
    # torch Linear weight is (out, in); we store the transpose (in, out).
    w1 = jax.random.normal(ks[3], (CONV_OUT, HIDDEN), jnp.float32) * 0.05
    b1 = jax.random.normal(ks[4], (1, HIDDEN), jnp.float32) * 0.05
    w2 = jax.random.normal(ks[5], (HIDDEN, 1), jnp.float32) * 0.05
    b2 = jax.random.normal(ks[6], (1, 1), jnp.float32) * 0.05
    return dict(embedding=emb, conv_w=conv_w, conv_b=conv_b,
                w1=w1, b1=b1, w2=w2, b2=b2)


def reference_forward(tokens, params):
    """Pure-JAX f32 reference (matches the PyTorch eval-mode module)."""
    emb = jnp.take(params['embedding'], tokens, axis=0)        # (B, L, E)
    B, L, _ = emb.shape
    l_out = L - CONV_K + 1
    acc = jnp.zeros((B, l_out, CONV_OUT), jnp.float32)
    for k in range(CONV_K):
        acc = acc + jnp.einsum('ble,ec->blc', emb[:, k:k + l_out, :],
                               params['conv_w'][k])
    acc = jnp.maximum(acc + params['conv_b'][None], 0.0)
    pooled = jnp.max(acc, axis=1)
    h = jnp.maximum(pooled @ params['w1'] + params['b1'], 0.0)
    return h @ params['w2'] + params['b2']


if __name__ == "__main__":
    key = jax.random.PRNGKey(0)
    pkey, tkey = jax.random.split(key)
    params = init_params(pkey)
    prep = prepare_params(params)            # hoisted: runs once, not per call
    tokens = jax.random.randint(tkey, (BATCH, MAX_SEQ_LEN), 0, VOCAB_SIZE,
                                dtype=jnp.int32)

    fwd = jax.jit(fake_news_detector_forward)
    out = jax.block_until_ready(fwd(tokens, prep))

    ref = reference_forward(tokens, params)
    assert out.shape == (BATCH, 1), out.shape
    # bf16 MXU operands with f32 accumulation -> looser tolerance vs f32 ref.
    assert jnp.allclose(out, ref, atol=2e-2, rtol=2e-2), (out, ref)
    print("KERNEL_OK")
</pallas_src>

<mosaic_0001>
module attributes {stable_mosaic.version = 11 : i64} {
  func.func @_fake_news_kernel(%arg0: memref<32x6xi32, #tpu.memory_space<vmem>>, %arg1: memref<256x128xbf16, #tpu.memory_space<vmem>>, %arg2: memref<128x128xbf16, #tpu.memory_space<vmem>>, %arg3: memref<1x128xf32, #tpu.memory_space<vmem>>, %arg4: memref<1x128xf32, #tpu.memory_space<vmem>>, %arg5: memref<1xf32, #tpu.memory_space<smem>>, %arg6: memref<2x1xf32, #tpu.memory_space<vmem>>) attributes {dimension_semantics = [], scalar_prefetch = 0 : i64, scratch_operands = 0 : i64, tpu.core_type = #tpu.core_type<tc>} {
    %c0 = arith.constant 0 : index
    %c0_0 = arith.constant 0 : index
    %0 = vector.load %arg0[%c0, %c0_0] : memref<32x6xi32, #tpu.memory_space<vmem>>, vector<32x6xi32>
    %1 = tpu.iota {dimensions = array<i32: 1>} : vector<32x256xi32>
    %cst = arith.constant 0.000000e+00 : f32
    %2 = vector.broadcast %cst : f32 to vector<32x256xf32>
    %3 = vector.extract_strided_slice %0 {offsets = [0, 0], sizes = [32, 1], strides = [1, 1]} : vector<32x6xi32> to vector<32x1xi32>
    %c0_i32 = arith.constant 0 : i32
    %4 = vector.broadcast %c0_i32 : i32 to vector<32x1xi32>
    %5 = arith.addi %3, %4 : vector<32x1xi32>
    %6 = vector.broadcast %5 : vector<32x1xi32> to vector<32x256xi32>
    %7 = arith.cmpi eq, %1, %6 : vector<32x256xi32>
    %cst_1 = arith.constant 1.000000e+00 : f32
    %cst_2 = arith.constant 0.000000e+00 : f32
    %8 = vector.broadcast %cst_1 : f32 to vector<32x256xf32>
    %9 = vector.broadcast %cst_2 : f32 to vector<32x256xf32>
    %10 = arith.select %7, %8, %9 : vector<32x256xi1>, vector<32x256xf32>
    %11 = arith.addf %2, %10 : vector<32x256xf32>
    %12 = vector.extract_strided_slice %0 {offsets = [0, 1], sizes = [32, 1], strides = [1, 1]} : vector<32x6xi32> to vector<32x1xi32>
    %c50_i32 = arith.constant 50 : i32
    %13 = vector.broadcast %c50_i32 : i32 to vector<32x1xi32>
    %14 = arith.addi %12, %13 : vector<32x1xi32>
    %15 = vector.broadcast %14 : vector<32x1xi32> to vector<32x256xi32>
    %16 = arith.cmpi eq, %1, %15 : vector<32x256xi32>
    %cst_3 = arith.constant 1.000000e+00 : f32
    %cst_4 = arith.constant 0.000000e+00 : f32
    %17 = vector.broadcast %cst_3 : f32 to vector<32x256xf32>
    %18 = vector.broadcast %cst_4 : f32 to vector<32x256xf32>
    %19 = arith.select %16, %17, %18 : vector<32x256xi1>, vector<32x256xf32>
    %20 = arith.addf %11, %19 : vector<32x256xf32>
    %21 = vector.extract_strided_slice %0 {offsets = [0, 2], sizes = [32, 1], strides = [1, 1]} : vector<32x6xi32> to vector<32x1xi32>
    %c100_i32 = arith.constant 100 : i32
    %22 = vector.broadcast %c100_i32 : i32 to vector<32x1xi32>
    %23 = arith.addi %21, %22 : vector<32x1xi32>
    %24 = vector.broadcast %23 : vector<32x1xi32> to vector<32x256xi32>
    %25 = arith.cmpi eq, %1, %24 : vector<32x256xi32>
    %cst_5 = arith.constant 1.000000e+00 : f32
    %cst_6 = arith.constant 0.000000e+00 : f32
    %26 = vector.broadcast %cst_5 : f32 to vector<32x256xf32>
    %27 = vector.broadcast %cst_6 : f32 to vector<32x256xf32>
    %28 = arith.select %25, %26, %27 : vector<32x256xi1>, vector<32x256xf32>
    %29 = arith.addf %20, %28 : vector<32x256xf32>
    %30 = vector.extract_strided_slice %0 {offsets = [0, 3], sizes = [32, 1], strides = [1, 1]} : vector<32x6xi32> to vector<32x1xi32>
    %c150_i32 = arith.constant 150 : i32
    %31 = vector.broadcast %c150_i32 : i32 to vector<32x1xi32>
    %32 = arith.addi %30, %31 : vector<32x1xi32>
    %33 = vector.broadcast %32 : vector<32x1xi32> to vector<32x256xi32>
    %34 = arith.cmpi eq, %1, %33 : vector<32x256xi32>
    %cst_7 = arith.constant 1.000000e+00 : f32
    %cst_8 = arith.constant 0.000000e+00 : f32
    %35 = vector.broadcast %cst_7 : f32 to vector<32x256xf32>
    %36 = vector.broadcast %cst_8 : f32 to vector<32x256xf32>
    %37 = arith.select %34, %35, %36 : vector<32x256xi1>, vector<32x256xf32>
    %38 = arith.addf %29, %37 : vector<32x256xf32>
    %39 = vector.extract_strided_slice %0 {offsets = [0, 4], sizes = [32, 1], strides = [1, 1]} : vector<32x6xi32> to vector<32x1xi32>
    %c200_i32 = arith.constant 200 : i32
    %40 = vector.broadcast %c200_i32 : i32 to vector<32x1xi32>
    %41 = arith.addi %39, %40 : vector<32x1xi32>
    %42 = vector.broadcast %41 : vector<32x1xi32> to vector<32x256xi32>
    %43 = arith.cmpi eq, %1, %42 : vector<32x256xi32>
    %cst_9 = arith.constant 1.000000e+00 : f32
    %cst_10 = arith.constant 0.000000e+00 : f32
    %44 = vector.broadcast %cst_9 : f32 to vector<32x256xf32>
    %45 = vector.broadcast %cst_10 : f32 to vector<32x256xf32>
    %46 = arith.select %43, %44, %45 : vector<32x256xi1>, vector<32x256xf32>
    %47 = arith.addf %38, %46 : vector<32x256xf32>
    %48 = vector.extract_strided_slice %0 {offsets = [0, 5], sizes = [32, 1], strides = [1, 1]} : vector<32x6xi32> to vector<32x1xi32>
    %c250_i32 = arith.constant 250 : i32
    %49 = vector.broadcast %c250_i32 : i32 to vector<32x1xi32>
    %50 = arith.addi %48, %49 : vector<32x1xi32>
    %51 = vector.broadcast %50 : vector<32x1xi32> to vector<32x256xi32>
    %52 = arith.cmpi eq, %1, %51 : vector<32x256xi32>
    %cst_11 = arith.constant 1.000000e+00 : f32
    %cst_12 = arith.constant 0.000000e+00 : f32
    %53 = vector.broadcast %cst_11 : f32 to vector<32x256xf32>
    %54 = vector.broadcast %cst_12 : f32 to vector<32x256xf32>
    %55 = arith.select %52, %53, %54 : vector<32x256xi1>, vector<32x256xf32>
    %56 = arith.addf %47, %55 : vector<32x256xf32>
    %57 = arith.truncf %56 : vector<32x256xf32> to vector<32x256xbf16>
    %c0_13 = arith.constant 0 : index
    %c0_14 = arith.constant 0 : index
    %58 = vector.load %arg1[%c0_13, %c0_14] : memref<256x128xbf16, #tpu.memory_space<vmem>>, vector<256x128xbf16>
    %cst_15 = arith.constant dense<0.000000e+00> : vector<32x128xf32>
    %59 = tpu.matmul %57, %58, %cst_15 {dimension_numbers = #tpu.dot_dimension_numbers<[1], [0], [0], [1], [0, 0, 1, 1], [], []>} : vector<32x256xbf16>, vector<256x128xbf16>, vector<32x128xf32> -> vector<32x128xf32>
    %cst_16 = arith.constant 0.000000e+00 : f32
    %60 = vector.broadcast %cst_16 : f32 to vector<32x128xf32>
    %61 = arith.maximumf %59, %60 : vector<32x128xf32>
    %62 = tpu.iota {dimensions = array<i32: 0>} : vector<2x128xi32>
    %cst_17 = arith.constant 0.000000e+00 : f32
    %63 = vector.broadcast %cst_17 : f32 to vector<2x128xf32>
    %64 = vector.extract_strided_slice %61 {offsets = [0, 0], sizes = [16, 128], strides = [1, 1]} : vector<32x128xf32> to vector<16x128xf32>
    %cst_18 = arith.constant dense<0xFF800000> : vector<128xf32>
    %65 = vector.multi_reduction <maximumf>, %64, %cst_18 [0] : vector<16x128xf32> to vector<128xf32>
    %66 = vector.shape_cast %65 : vector<128xf32> to vector<1x128xf32>
    %c0_i32_19 = arith.constant 0 : i32
    %67 = vector.broadcast %c0_i32_19 : i32 to vector<2x128xi32>
    %68 = arith.cmpi eq, %62, %67 : vector<2x128xi32>
    %69 = vector.shape_cast %66 : vector<1x128xf32> to vector<1x128xf32>
    %70 = vector.broadcast %69 : vector<1x128xf32> to vector<2x128xf32>
    %71 = arith.select %68, %70, %63 : vector<2x128xi1>, vector<2x128xf32>
    %72 = vector.extract_strided_slice %61 {offsets = [16, 0], sizes = [16, 128], strides = [1, 1]} : vector<32x128xf32> to vector<16x128xf32>
    %cst_20 = arith.constant dense<0xFF800000> : vector<128xf32>
    %73 = vector.multi_reduction <maximumf>, %72, %cst_20 [0] : vector<16x128xf32> to vector<128xf32>
    %74 = vector.shape_cast %73 : vector<128xf32> to vector<1x128xf32>
    %c1_i32 = arith.constant 1 : i32
    %75 = vector.broadcast %c1_i32 : i32 to vector<2x128xi32>
    %76 = arith.cmpi eq, %62, %75 : vector<2x128xi32>
    %77 = vector.shape_cast %74 : vector<1x128xf32> to vector<1x128xf32>
    %78 = vector.broadcast %77 : vector<1x128xf32> to vector<2x128xf32>
    %79 = arith.select %76, %78, %71 : vector<2x128xi1>, vector<2x128xf32>
    %80 = arith.truncf %79 : vector<2x128xf32> to vector<2x128xbf16>
    %c0_21 = arith.constant 0 : index
    %c0_22 = arith.constant 0 : index
    %81 = vector.load %arg2[%c0_21, %c0_22] : memref<128x128xbf16, #tpu.memory_space<vmem>>, vector<128x128xbf16>
    %cst_23 = arith.constant dense<0.000000e+00> : vector<2x128xf32>
    %82 = tpu.matmul %80, %81, %cst_23 {dimension_numbers = #tpu.dot_dimension_numbers<[1], [0], [0], [1], [0, 0, 1, 1], [], []>} : vector<2x128xbf16>, vector<128x128xbf16>, vector<2x128xf32> -> vector<2x128xf32>
    %c0_24 = arith.constant 0 : index
    %c0_25 = arith.constant 0 : index
    %83 = vector.load %arg3[%c0_24, %c0_25] : memref<1x128xf32, #tpu.memory_space<vmem>>, vector<1x128xf32>
    %84 = vector.broadcast %83 : vector<1x128xf32> to vector<2x128xf32>
    %85 = arith.addf %82, %84 : vector<2x128xf32>
    %cst_26 = arith.constant 0.000000e+00 : f32
    %86 = vector.broadcast %cst_26 : f32 to vector<2x128xf32>
    %87 = arith.maximumf %85, %86 : vector<2x128xf32>
    %c0_27 = arith.constant 0 : index
    %c0_28 = arith.constant 0 : index
    %88 = vector.load %arg4[%c0_27, %c0_28] : memref<1x128xf32, #tpu.memory_space<vmem>>, vector<1x128xf32>
    %89 = vector.broadcast %88 : vector<1x128xf32> to vector<2x128xf32>
    %90 = arith.mulf %87, %89 : vector<2x128xf32>
    %cst_29 = arith.constant dense<0.000000e+00> : vector<2xf32>
    %91 = vector.multi_reduction <add>, %90, %cst_29 [1] : vector<2x128xf32> to vector<2xf32>
    %92 = vector.shape_cast %91 : vector<2xf32> to vector<2x1xf32>
    %c0_30 = arith.constant 0 : index
    %93 = memref.load %arg5[%c0_30] : memref<1xf32, #tpu.memory_space<smem>>
    %94 = vector.broadcast %93 : f32 to vector<2x1xf32>
    %95 = arith.addf %92, %94 : vector<2x1xf32>
    %c0_31 = arith.constant 0 : index
    %c0_32 = arith.constant 0 : index
    %96 = vector.load %arg6[%c0_31, %c0_32] : memref<2x1xf32, #tpu.memory_space<vmem>>, vector<2x1xf32>
    tpu.vector_store %arg6[%c0_31, %c0_32], %95 {strides = array<i32>} : memref<2x1xf32, #tpu.memory_space<vmem>>, vector<2x1xf32>,
    return
  }
}

</mosaic_0001>

<llo_original>
// kernel: fake_news_detector_forward.1
$region0: #{fake_news_detector_forward.1}
  #allocation0 [shape = 'u32[]', space=smem, size = 0x4, offset = 0x4, fixed_abs, tag = 'smem constant byte address 0x4 - core index']
  #allocation1 [shape = 'u32[144,128]{1,0:T(1,128)}', space=vmem, size = 0x12000, scoped, tag = 'internal scratch']
  #allocation2 [shape = 'f32[1]{0:T(128)S(6)}', space=smem, size = 0x200, scoped, tag = 'scoped memory for fake_news_detector_forward.1']
  %s0 = inlined_call_operand.vmem [shape: s32[32,6], index: 0, kind: input, shape index: {}]
  %s1 = inlined_call_operand.vmem [shape: bf16[256,128], index: 1, kind: input, shape index: {}]
  %s2 = inlined_call_operand.hbm [shape: bf16[128,128], index: 2, kind: input, shape index: {}]
  %s3 = inlined_call_operand.vmem [shape: f32[1,128], index: 3, kind: input, shape index: {}]
  %s4 = inlined_call_operand.vmem [shape: f32[1,128], index: 4, kind: input, shape index: {}]
  %s5 = inlined_call_operand.<no memory space> [shape: f32[1], index: 5, kind: input, shape index: {}]
  %s6 = inlined_call_operand.vmem [shape: f32[2,1], index: 6, kind: output, shape index: {}]
  %s7 = sld [smem:[#allocation0]]
  $region38: #{fake_news_detector_forward.1} parent=0
    _
  %s9 = ssub.s32 1, %s7
  %s10 = scalar_select 0, %s9, %s7
  %11 = sst [smem:[#allocation2]] %s5
  $region1: #{fake_news_detector_forward.1} parent=0
    #allocation3 [shape = 'u8[32768]{0}', space=vmem, size = 0x8000, scoped, tag = 'input window, operand 2, single buffered']
    #allocation4 [shape = 's32[1]{0}', space=sflag, size = 0x4, scoped, tag = 'scoped memory for fake_news_detector_forward.1']
    %12 = vsyncpa [#allocation4], 0
    // Predicated region
    $region2: #{fake_news_detector_forward.1} parent=1 // pred_check
      _
    $region3: #{fake_news_detector_forward.1} parent=1 // pred_check_branch
      %14 = sbr.rel (0) target = $region5
    $region4: #{fake_news_detector_forward.1} parent=1 // pred_region
      _
    $region5: #{fake_news_detector_forward.1} parent=1 // pred_fallthru
      _
    // Predicated region
    $region6: #{fake_news_detector_forward.1} parent=1 // pred_check
      _
    $region7: #{fake_news_detector_forward.1} parent=1 // pred_check_branch
      %16 = sbr.rel (0) target = $region9
    $region8: #{fake_news_detector_forward.1} parent=1 // pred_region
      _
    $region9: #{fake_news_detector_forward.1} parent=1 // pred_fallthru
      _
    // Predicated region
    $region10: #{fake_news_detector_forward.1} parent=1 // pred_check
      _
    $region11: #{fake_news_detector_forward.1} parent=1 // pred_check_branch
      %18 = sbr.rel (0) target = $region13
    $region12: #{fake_news_detector_forward.1} parent=1 // pred_region
      %s20 = ssub.s32 1024, 1024
      %21 = vsyncadd [#allocation4], %s20
      %s22 = sshll.u32 [#allocation3], 4
      %s23 = int_to_ptr.vmem [resolvable:$true] %s22
      %28 = dma.hbm_to_vmem [thread:$0]  %s2, 1024, %s23, [#allocation4], 64, 64, 4
    $region13: #{fake_news_detector_forward.1} parent=1 // pred_fallthru
      _
    // Predicated region
    $region14: #{fake_news_detector_forward.1} parent=1 // pred_check
      _
    $region15: #{fake_news_detector_forward.1} parent=1 // pred_check_branch
      %30 = sbr.rel (0) target = $region17
    $region16: #{fake_news_detector_forward.1} parent=1 // pred_region
      _
    $region17: #{fake_news_detector_forward.1} parent=1 // pred_fallthru
      _
    // Predicated region
    $region18: #{fake_news_detector_forward.1} parent=1 // pred_check
      _
    $region19: #{fake_news_detector_forward.1} parent=1 // pred_check_branch
      %32 = sbr.rel (0) target = $region21
    $region20: #{fake_news_detector_forward.1} parent=1 // pred_region
      _
    $region21: #{fake_news_detector_forward.1} parent=1 // pred_fallthru
      _
    // Predicated region
    $region22: #{fake_news_detector_forward.1} parent=1 // pred_check
      _
    $region23: #{fake_news_detector_forward.1} parent=1 // pred_check_branch
      %34 = sbr.rel (0) target = $region25
    $region24: #{fake_news_detector_forward.1} parent=1 // pred_region
      _
    $region25: #{fake_news_detector_forward.1} parent=1 // pred_fallthru
      _
    // Predicated region
    $region26: #{fake_news_detector_forward.1} parent=1 // pred_check
      _
    $region27: #{fake_news_detector_forward.1} parent=1 // pred_check_branch
      %36 = sbr.rel (0) target = $region29
    $region28: #{fake_news_detector_forward.1} parent=1 // pred_region
      %37 = dma.done [#allocation4], 1024
    $region29: #{fake_news_detector_forward.1} parent=1 // pred_fallthru
      _
    %v39 = vld [vmem:[%s0] sm:$0xff]
    %v40 = vld [vmem:[%s0 + $0x8] sm:$0xff]
    %v41 = vld [vmem:[%s0 + $0x10] sm:$0xff]
    %v42 = vld [vmem:[%s0 + $0x18] sm:$0xff]
    %v43 = vlaneseq
    %v44 = vand.u32 %v43, 127
    %v45 = vadd.s32 %v44, 128
    %46 = vset.pattern.permute.xlu0 0
    %47 = vperm.xlu0 %46, %v39
    %v48 = vpop.permute.xlu0 %47
    %49 = vset.pattern.permute.xlu0 0
    %50 = vperm.xlu0 %49, %v40
    %v51 = vpop.permute.xlu0 %50
    %52 = vset.pattern.permute.xlu0 0
    %53 = vperm.xlu0 %52, %v41
    %v54 = vpop.permute.xlu0 %53
    %55 = vset.pattern.permute.xlu0 0
    %56 = vperm.xlu0 %55, %v42
    %v57 = vpop.permute.xlu0 %56
    %vm58 = vcmp.eq.s32.totalorder %v44, %v48
    %vm59 = vcmp.eq.s32.totalorder %v45, %v48
    %vm60 = vcmp.eq.s32.totalorder %v44, %v51
    %vm61 = vcmp.eq.s32.totalorder %v45, %v51
    %vm62 = vcmp.eq.s32.totalorder %v44, %v54
    %vm63 = vcmp.eq.s32.totalorder %v45, %v54
    %vm64 = vcmp.eq.s32.totalorder %v44, %v57
    %vm65 = vcmp.eq.s32.totalorder %v45, %v57
    %v66 = vsel %vm58, 1.0, 0.0
    %v67 = vsel %vm59, 1.0, 0.0
    %v68 = vsel %vm60, 1.0, 0.0
    %v69 = vsel %vm61, 1.0, 0.0
    %v70 = vsel %vm62, 1.0, 0.0
    %v71 = vsel %vm63, 1.0, 0.0
    %v72 = vsel %vm64, 1.0, 0.0
    %v73 = vsel %vm65, 1.0, 0.0
    %v74 = vadd.f32 %v66, 0.0
    %v75 = vadd.f32 %v67, 0.0
    %v76 = vadd.f32 %v68, 0.0
    %v77 = vadd.f32 %v69, 0.0
    %v78 = vadd.f32 %v70, 0.0
    %v79 = vadd.f32 %v71, 0.0
    %v80 = vadd.f32 %v72, 0.0
    %v81 = vadd.f32 %v73, 0.0
    %v82 = vadd.s32 %v39, 50
    %v83 = vadd.s32 %v40, 50
    %v84 = vadd.s32 %v41, 50
    %v85 = vadd.s32 %v42, 50
    %86 = vset.pattern.permute.xlu0 1
    %87 = vperm.xlu0 %86, %v82
    %v88 = vpop.permute.xlu0 %87
    %89 = vset.pattern.permute.xlu0 1
    %90 = vperm.xlu0 %89, %v83
    %v91 = vpop.permute.xlu0 %90
    %92 = vset.pattern.permute.xlu0 1
    %93 = vperm.xlu0 %92, %v84
    %v94 = vpop.permute.xlu0 %93
    %95 = vset.pattern.permute.xlu0 1
    %96 = vperm.xlu0 %95, %v85
    %v97 = vpop.permute.xlu0 %96
    %vm98 = vcmp.eq.s32.totalorder %v44, %v88
    %vm99 = vcmp.eq.s32.totalorder %v45, %v88
    %vm100 = vcmp.eq.s32.totalorder %v44, %v91
    %vm101 = vcmp.eq.s32.totalorder %v45, %v91
    %vm102 = vcmp.eq.s32.totalorder %v44, %v94
    %vm103 = vcmp.eq.s32.totalorder %v45, %v94
    %vm104 = vcmp.eq.s32.totalorder %v44, %v97
    %vm105 = vcmp.eq.s32.totalorder %v45, %v97
    %v106 = vsel %vm98, 1.0, 0.0
    %v107 = vsel %vm99, 1.0, 0.0
    %v108 = vsel %vm100, 1.0, 0.0
    %v109 = vsel %vm101, 1.0, 0.0
    %v110 = vsel %vm102, 1.0, 0.0
    %v111 = vsel %vm103, 1.0, 0.0
    %v112 = vsel %vm104, 1.0, 0.0
    %v113 = vsel %vm105, 1.0, 0.0
    %v114 = vadd.f32 %v74, %v106
    %v115 = vadd.f32 %v75, %v107
    %v116 = vadd.f32 %v76, %v108
    %v117 = vadd.f32 %v77, %v109
    %v118 = vadd.f32 %v78, %v110
    %v119 = vadd.f32 %v79, %v111
    %v120 = vadd.f32 %v80, %v112
    %v121 = vadd.f32 %v81, %v113
    %v122 = vadd.s32 %v39, 100
    %v123 = vadd.s32 %v40, 100
    %v124 = vadd.s32 %v41, 100
    %v125 = vadd.s32 %v42, 100
    %126 = vset.pattern.permute.xlu0 2
    %127 = vperm.xlu0 %126, %v122
    %v128 = vpop.permute.xlu0 %127
    %129 = vset.pattern.permute.xlu0 2
    %130 = vperm.xlu0 %129, %v123
    %v131 = vpop.permute.xlu0 %130
    %132 = vset.pattern.permute.xlu0 2
    %133 = vperm.xlu0 %132, %v124
    %v134 = vpop.permute.xlu0 %133
    %135 = vset.pattern.permute.xlu0 2
    %136 = vperm.xlu0 %135, %v125
    %v137 = vpop.permute.xlu0 %136
    %vm138 = vcmp.eq.s32.totalorder %v44, %v128
    %vm139 = vcmp.eq.s32.totalorder %v45, %v128
    %vm140 = vcmp.eq.s32.totalorder %v44, %v131
    %vm141 = vcmp.eq.s32.totalorder %v45, %v131
    %vm142 = vcmp.eq.s32.totalorder %v44, %v134
    %vm143 = vcmp.eq.s32.totalorder %v45, %v134
    %vm144 = vcmp.eq.s32.totalorder %v44, %v137
    %vm145 = vcmp.eq.s32.totalorder %v45, %v137
    %v146 = vsel %vm138, 1.0, 0.0
    %v147 = vsel %vm139, 1.0, 0.0
    %v148 = vsel %vm140, 1.0, 0.0
    %v149 = vsel %vm141, 1.0, 0.0
    %v150 = vsel %vm142, 1.0, 0.0
    %v151 = vsel %vm143, 1.0, 0.0
    %v152 = vsel %vm144, 1.0, 0.0
    %v153 = vsel %vm145, 1.0, 0.0
    %v154 = vadd.f32 %v114, %v146
    %v155 = vadd.f32 %v115, %v147
    %v156 = vadd.f32 %v116, %v148
    %v157 = vadd.f32 %v117, %v149
    %v158 = vadd.f32 %v118, %v150
    %v159 = vadd.f32 %v119, %v151
    %v160 = vadd.f32 %v120, %v152
    %v161 = vadd.f32 %v121, %v153
    %v162 = vadd.s32 %v39, 150
    %v163 = vadd.s32 %v40, 150
    %v164 = vadd.s32 %v41, 150
    %v165 = vadd.s32 %v42, 150
    %166 = vset.pattern.permute.xlu0 3
    %167 = vperm.xlu0 %166, %v162
    %v168 = vpop.permute.xlu0 %167
    %169 = vset.pattern.permute.xlu0 3
    %170 = vperm.xlu0 %169, %v163
    %v171 = vpop.permute.xlu0 %170
    %172 = vset.pattern.permute.xlu0 3
    %173 = vperm.xlu0 %172, %v164
    %v174 = vpop.permute.xlu0 %173
    %175 = vset.pattern.permute.xlu0 3
    %176 = vperm.xlu0 %175, %v165
    %v177 = vpop.permute.xlu0 %176
    %vm178 = vcmp.eq.s32.totalorder %v44, %v168
    %vm179 = vcmp.eq.s32.totalorder %v45, %v168
    %vm180 = vcmp.eq.s32.totalorder %v44, %v171
    %vm181 = vcmp.eq.s32.totalorder %v45, %v171
    %vm182 = vcmp.eq.s32.totalorder %v44, %v174
    %vm183 = vcmp.eq.s32.totalorder %v45, %v174
    %vm184 = vcmp.eq.s32.totalorder %v44, %v177
    %vm185 = vcmp.eq.s32.totalorder %v45, %v177
    %v186 = vsel %vm178, 1.0, 0.0
    %v187 = vsel %vm179, 1.0, 0.0
    %v188 = vsel %vm180, 1.0, 0.0
    %v189 = vsel %vm181, 1.0, 0.0
    %v190 = vsel %vm182, 1.0, 0.0
    %v191 = vsel %vm183, 1.0, 0.0
    %v192 = vsel %vm184, 1.0, 0.0
    %v193 = vsel %vm185, 1.0, 0.0
    %v194 = vadd.f32 %v154, %v186
    %v195 = vadd.f32 %v155, %v187
    %v196 = vadd.f32 %v156, %v188
    %v197 = vadd.f32 %v157, %v189
    %v198 = vadd.f32 %v158, %v190
    %v199 = vadd.f32 %v159, %v191
    %v200 = vadd.f32 %v160, %v192
    %v201 = vadd.f32 %v161, %v193
    %v202 = vadd.s32 %v39, 200
    %v203 = vadd.s32 %v40, 200
    %v204 = vadd.s32 %v41, 200
    %v205 = vadd.s32 %v42, 200
    %206 = vset.pattern.permute.xlu0 4
    %207 = vperm.xlu0 %206, %v202
    %v208 = vpop.permute.xlu0 %207
    %209 = vset.pattern.permute.xlu0 4
    %210 = vperm.xlu0 %209, %v203
    %v211 = vpop.permute.xlu0 %210
    %212 = vset.pattern.permute.xlu0 4
    %213 = vperm.xlu0 %212, %v204
    %v214 = vpop.permute.xlu0 %213
    %215 = vset.pattern.permute.xlu0 4
    %216 = vperm.xlu0 %215, %v205
    %v217 = vpop.permute.xlu0 %216
    %vm218 = vcmp.eq.s32.totalorder %v44, %v208
    %vm219 = vcmp.eq.s32.totalorder %v45, %v208
    %vm220 = vcmp.eq.s32.totalorder %v44, %v211
    %vm221 = vcmp.eq.s32.totalorder %v45, %v211
    %vm222 = vcmp.eq.s32.totalorder %v44, %v214
    %vm223 = vcmp.eq.s32.totalorder %v45, %v214
    %vm224 = vcmp.eq.s32.totalorder %v44, %v217
    %vm225 = vcmp.eq.s32.totalorder %v45, %v217
    %v226 = vsel %vm218, 1.0, 0.0
    %v227 = vsel %vm219, 1.0, 0.0
    %v228 = vsel %vm220, 1.0, 0.0
    %v229 = vsel %vm221, 1.0, 0.0
    %v230 = vsel %vm222, 1.0, 0.0
    %v231 = vsel %vm223, 1.0, 0.0
    %v232 = vsel %vm224, 1.0, 0.0
    %v233 = vsel %vm225, 1.0, 0.0
    %v234 = vadd.f32 %v194, %v226
    %v235 = vadd.f32 %v195, %v227
    %v236 = vadd.f32 %v196, %v228
    %v237 = vadd.f32 %v197, %v229
    %v238 = vadd.f32 %v198, %v230
    %v239 = vadd.f32 %v199, %v231
    %v240 = vadd.f32 %v200, %v232
    %v241 = vadd.f32 %v201, %v233
    %v242 = vadd.s32 %v39, 250
    %v243 = vadd.s32 %v40, 250
    %v244 = vadd.s32 %v41, 250
    %v245 = vadd.s32 %v42, 250
    %246 = vset.pattern.permute.xlu0 5
    %247 = vperm.xlu0 %246, %v242
    %v248 = vpop.permute.xlu0 %247
    %249 = vset.pattern.permute.xlu0 5
    %250 = vperm.xlu0 %249, %v243
    %v251 = vpop.permute.xlu0 %250
    %252 = vset.pattern.permute.xlu0 5
    %253 = vperm.xlu0 %252, %v244
    %v254 = vpop.permute.xlu0 %253
    %255 = vset.pattern.permute.xlu0 5
    %256 = vperm.xlu0 %255, %v245
    %v257 = vpop.permute.xlu0 %256
    %vm258 = vcmp.eq.s32.totalorder %v44, %v248
    %vm259 = vcmp.eq.s32.totalorder %v45, %v248
    %vm260 = vcmp.eq.s32.totalorder %v44, %v251
    %vm261 = vcmp.eq.s32.totalorder %v45, %v251
    %vm262 = vcmp.eq.s32.totalorder %v44, %v254
    %vm263 = vcmp.eq.s32.totalorder %v45, %v254
    %vm264 = vcmp.eq.s32.totalorder %v44, %v257
    %vm265 = vcmp.eq.s32.totalorder %v45, %v257
    %v266 = vsel %vm258, 1.0, 0.0
    %v267 = vsel %vm259, 1.0, 0.0
    %v268 = vsel %vm260, 1.0, 0.0
    %v269 = vsel %vm261, 1.0, 0.0
    %v270 = vsel %vm262, 1.0, 0.0
    %v271 = vsel %vm263, 1.0, 0.0
    %v272 = vsel %vm264, 1.0, 0.0
    %v273 = vsel %vm265, 1.0, 0.0
    %v274 = vadd.f32 %v234, %v266
    %v275 = vadd.f32 %v235, %v267
    %v276 = vadd.f32 %v236, %v268
    %v277 = vadd.f32 %v237, %v269
    %v278 = vadd.f32 %v238, %v270
    %v279 = vadd.f32 %v239, %v271
    %v280 = vadd.f32 %v240, %v272
    %v281 = vadd.f32 %v241, %v273
    %v282 = vpack.c.bf16 %v276, %v274
    %v283 = vpack.c.bf16 %v277, %v275
    %v284 = vpack.c.bf16 %v280, %v278
    %v285 = vpack.c.bf16 %v281, %v279
    %v286 = vld [vmem:[%s1] sm:$0xf]
    %v287 = vld [vmem:[%s1 + $0x4] sm:$0xf]
    %v288 = vld [vmem:[%s1 + $0x8] sm:$0xf]
    %v289 = vld [vmem:[%s1 + $0xc] sm:$0xf]
    %v290 = vld [vmem:[%s1 + $0x10] sm:$0xf]
    %v291 = vld [vmem:[%s1 + $0x14] sm:$0xf]
    %v292 = vld [vmem:[%s1 + $0x18] sm:$0xf]
    %v293 = vld [vmem:[%s1 + $0x1c] sm:$0xf]
    %v294 = vld [vmem:[%s1 + $0x20] sm:$0xf]
    %v295 = vld [vmem:[%s1 + $0x24] sm:$0xf]
    %v296 = vld [vmem:[%s1 + $0x28] sm:$0xf]
    %v297 = vld [vmem:[%s1 + $0x2c] sm:$0xf]
    %v298 = vld [vmem:[%s1 + $0x30] sm:$0xf]
    %v299 = vld [vmem:[%s1 + $0x34] sm:$0xf]
    %v300 = vld [vmem:[%s1 + $0x38] sm:$0xf]
    %v301 = vld [vmem:[%s1 + $0x3c] sm:$0xf]
    %v302 = vld [vmem:[%s1 + $0x40] sm:$0xf]
    %v303 = vld [vmem:[%s1 + $0x44] sm:$0xf]
    %v304 = vld [vmem:[%s1 + $0x48] sm:$0xf]
    %v305 = vld [vmem:[%s1 + $0x4c] sm:$0xf]
    %v306 = vld [vmem:[%s1 + $0x50] sm:$0xf]
    %v307 = vld [vmem:[%s1 + $0x54] sm:$0xf]
    %v308 = vld [vmem:[%s1 + $0x58] sm:$0xf]
    %v309 = vld [vmem:[%s1 + $0x5c] sm:$0xf]
    %v310 = vld [vmem:[%s1 + $0x60] sm:$0xf]
    %v311 = vld [vmem:[%s1 + $0x64] sm:$0xf]
    %v312 = vld [vmem:[%s1 + $0x68] sm:$0xf]
    %v313 = vld [vmem:[%s1 + $0x6c] sm:$0xf]
    %v314 = vld [vmem:[%s1 + $0x70] sm:$0xf]
    %v315 = vld [vmem:[%s1 + $0x74] sm:$0xf]
    %v316 = vld [vmem:[%s1 + $0x78] sm:$0xf]
    %v317 = vld [vmem:[%s1 + $0x7c] sm:$0xf]
    %v350 = vunpack.c.l.b16 %v286
    %v351 = vunpack.c.l.b16 %v287
    %v352 = vunpack.c.l.b16 %v288
    %v353 = vunpack.c.l.b16 %v289
    %v354 = vunpack.c.l.b16 %v290
    %v355 = vunpack.c.l.b16 %v291
    %v356 = vunpack.c.l.b16 %v292
    %v357 = vunpack.c.l.b16 %v293
    %v358 = vunpack.c.l.b16 %v294
    %v359 = vunpack.c.l.b16 %v295
    %v360 = vunpack.c.l.b16 %v296
    %v361 = vunpack.c.l.b16 %v297
    %v362 = vunpack.c.l.b16 %v298
    %v363 = vunpack.c.l.b16 %v299
    %v364 = vunpack.c.l.b16 %v300
    %v365 = vunpack.c.l.b16 %v301
    %v366 = vunpack.c.l.b16 %v302
    %v367 = vunpack.c.l.b16 %v303
    %v368 = vunpack.c.l.b16 %v304
    %v369 = vunpack.c.l.b16 %v305
    %v370 = vunpack.c.l.b16 %v306
    %v371 = vunpack.c.l.b16 %v307
    %v372 = vunpack.c.l.b16 %v308
    %v373 = vunpack.c.l.b16 %v309
    %v374 = vunpack.c.l.b16 %v310
    %v375 = vunpack.c.l.b16 %v311
    %v376 = vunpack.c.l.b16 %v312
    %v377 = vunpack.c.l.b16 %v313
    %v378 = vunpack.c.l.b16 %v314
    %v379 = vunpack.c.l.b16 %v315
    %v380 = vunpack.c.l.b16 %v316
    %v381 = vunpack.c.l.b16 %v317
    %v382 = vpack.c.b16 %v351, %v350
    %v383 = vpack.c.b16 %v353, %v352
    %v384 = vpack.c.b16 %v355, %v354
    %v385 = vpack.c.b16 %v357, %v356
    %v386 = vpack.c.b16 %v359, %v358
    %v387 = vpack.c.b16 %v361, %v360
    %v388 = vpack.c.b16 %v363, %v362
    %v389 = vpack.c.b16 %v365, %v364
    %v390 = vpack.c.b16 %v367, %v366
    %v391 = vpack.c.b16 %v369, %v368
    %v392 = vpack.c.b16 %v371, %v370
    %v393 = vpack.c.b16 %v373, %v372
    %v394 = vpack.c.b16 %v375, %v374
    %v395 = vpack.c.b16 %v377, %v376
    %v396 = vpack.c.b16 %v379, %v378
    %v397 = vpack.c.b16 %v381, %v380
    %414 = vmatprep.subr.bf16.mxu0 0
    %415 = vmatpush1.bf16.msra.mxu0 %v382
    %416 = vmatprep.subr.bf16.mxu0 0
    %417 = vmatpush1.bf16.msra.mxu0 %v383
    %418 = vmatprep.subr.bf16.mxu0 0
    %419 = vmatpush1.bf16.msra.mxu0 %v384
    %420 = vmatprep.subr.bf16.mxu0 0
    %421 = vmatpush1.bf16.msra.mxu0 %v385
    %422 = vmatprep.subr.bf16.mxu0 0
    %423 = vmatpush1.bf16.msra.mxu0 %v386
    %424 = vmatprep.subr.bf16.mxu0 0
    %425 = vmatpush1.bf16.msra.mxu0 %v387
    %426 = vmatprep.subr.bf16.mxu0 0
    %427 = vmatpush1.bf16.msra.mxu0 %v388
    %428 = vmatprep.subr.bf16.mxu0 0
    %429 = vmatpush1.bf16.msra.mxu0 %v389
    %430 = vmatprep.subr.bf16.mxu0 0
    %431 = vmatpush1.bf16.msra.mxu0 %v390
    %432 = vmatprep.subr.bf16.mxu0 0
    %433 = vmatpush1.bf16.msra.mxu0 %v391
    %434 = vmatprep.subr.bf16.mxu0 0
    %435 = vmatpush1.bf16.msra.mxu0 %v392
    %436 = vmatprep.subr.bf16.mxu0 0
    %437 = vmatpush1.bf16.msra.mxu0 %v393
    %438 = vmatprep.subr.bf16.mxu0 0
    %439 = vmatpush1.bf16.msra.mxu0 %v394
    %440 = vmatprep.subr.bf16.mxu0 0
    %441 = vmatpush1.bf16.msra.mxu0 %v395
    %442 = vmatprep.subr.bf16.mxu0 0
    %443 = vmatpush1.bf16.msra.mxu0 %v396
    %444 = vmatprep.subr.bf16.mxu0 0
    %445 = vmatpush1.bf16.msra.mxu0 %v397
    %446 = vmatprep.mubr.bf16.mxu0 %v283
    %447 = vmatmul.mubr.bf16.gmra.mrb[0].mxu0 %v282
    %v448 = vpop.f32.mrb[0].mxu0
    %v449 = vadd.f32 0.0, %v448
    %v450 = vpop.f32.mrb[0].mxu0
    %v451 = vpop.f32.mrb[0].mxu0
    %v452 = vadd.f32 0.0, %v451
    %v453 = vpop.f32.mrb[0].mxu0
    %454 = vmatprep.mubr.bf16.mxu0 %v285
    %455 = vmatmul.mubr.bf16.gmra.mrb[0].mxu0 %v284
    %v456 = vpop.f32.mrb[0].mxu0
    %v457 = vadd.f32 0.0, %v456
    %v458 = vpop.f32.mrb[0].mxu0
    %v459 = vpop.f32.mrb[0].mxu0
    %v460 = vadd.f32 0.0, %v459
    %v461 = vpop.f32.mrb[0].mxu0
    %462 = vdwg.mxu0
    %v463 = vmax.f32 %v449, 0.0
    %v464 = vmax.f32 %v452, 0.0
    %v465 = vmax.f32 %v457, 0.0
    %v466 = vmax.f32 %v460, 0.0
    %v467 = vlaneseq
    %v468 = vshrl.u32 %v467, 7
    %v469 = vmax.f32 %v463, %v464
    %v470 = vrot.slane %v469, 4
    %v471 = vmax.f32 %v469, %v470
    %v472 = vrot.slane %v471, 2
    %v473 = vmax.f32 %v471, %v472
    %v474 = vrot.slane %v473, 1
    %v475 = vmax.f32 %v473, %v474
    %vm476 = vcmp.eq.s32.totalorder %v468, 0
    %v477 = vsel %vm476, %v475, 0.0
    %v478 = vmax.f32 %v465, %v466
    %v479 = vrot.slane %v478, 4
    %v480 = vmax.f32 %v478, %v479
    %v481 = vrot.slane %v480, 2
    %v482 = vmax.f32 %v480, %v481
    %v483 = vrot.slane %v482, 1
    %v484 = vmax.f32 %v482, %v483
    %vm485 = vcmp.eq.s32.totalorder %v468, 1
    %v486 = vsel %vm485, %v484, %v477
    %v487 = vpack.c.bf16 %v486, %v486
    %v488 = vld [vmem:[#allocation3] sm:$0xf]
    %v489 = vld [vmem:[#allocation3 + $0x4] sm:$0xf]
    %v490 = vld [vmem:[#allocation3 + $0x8] sm:$0xf]
    %v491 = vld [vmem:[#allocation3 + $0xc] sm:$0xf]
    %v492 = vld [vmem:[#allocation3 + $0x10] sm:$0xf]
    %v493 = vld [vmem:[#allocation3 + $0x14] sm:$0xf]
    %v494 = vld [vmem:[#allocation3 + $0x18] sm:$0xf]
    %v495 = vld [vmem:[#allocation3 + $0x1c] sm:$0xf]
    %v496 = vld [vmem:[#allocation3 + $0x20] sm:$0xf]
    %v497 = vld [vmem:[#allocation3 + $0x24] sm:$0xf]
    %v498 = vld [vmem:[#allocation3 + $0x28] sm:$0xf]
    %v499 = vld [vmem:[#allocation3 + $0x2c] sm:$0xf]
    %v500 = vld [vmem:[#allocation3 + $0x30] sm:$0xf]
    %v501 = vld [vmem:[#allocation3 + $0x34] sm:$0xf]
    %v502 = vld [vmem:[#allocation3 + $0x38] sm:$0xf]
    %v503 = vld [vmem:[#allocation3 + $0x3c] sm:$0xf]
    %v504 = vld [vmem:[%s3] sm:$0x1]
    %v506 = vlaneseq
    %v507 = vshrl.u32 %v506, 7
    %v508 = vsub.s32 0, %v507
    %v509 = vrot.slane %v504, %v508
    %v527 = vunpack.c.l.b16 %v488
    %v528 = vunpack.c.l.b16 %v489
    %v529 = vunpack.c.l.b16 %v490
    %v530 = vunpack.c.l.b16 %v491
    %v531 = vunpack.c.l.b16 %v492
    %v532 = vunpack.c.l.b16 %v493
    %v533 = vunpack.c.l.b16 %v494
    %v534 = vunpack.c.l.b16 %v495
    %v535 = vunpack.c.l.b16 %v496
    %v536 = vunpack.c.l.b16 %v497
    %v537 = vunpack.c.l.b16 %v498
    %v538 = vunpack.c.l.b16 %v499
    %v539 = vunpack.c.l.b16 %v500
    %v540 = vunpack.c.l.b16 %v501
    %v541 = vunpack.c.l.b16 %v502
    %v542 = vunpack.c.l.b16 %v503
    %v543 = vpack.c.b16 %v528, %v527
    %v544 = vpack.c.b16 %v530, %v529
    %v545 = vpack.c.b16 %v532, %v531
    %v546 = vpack.c.b16 %v534, %v533
    %v547 = vpack.c.b16 %v536, %v535
    %v548 = vpack.c.b16 %v538, %v537
    %v549 = vpack.c.b16 %v540, %v539
    %v550 = vpack.c.b16 %v542, %v541
    %559 = vmatprep.subr.bf16.mxu0 0
    %560 = vmatpush1.bf16.msra.mxu0 %v543
    %561 = vmatprep.subr.bf16.mxu0 0
    %562 = vmatpush1.bf16.msra.mxu0 %v544
    %563 = vmatprep.subr.bf16.mxu0 0
    %564 = vmatpush1.bf16.msra.mxu0 %v545
    %565 = vmatprep.subr.bf16.mxu0 0
    %566 = vmatpush1.bf16.msra.mxu0 %v546
    %567 = vmatprep.subr.bf16.mxu0 0
    %568 = vmatpush1.bf16.msra.mxu0 %v547
    %569 = vmatprep.subr.bf16.mxu0 0
    %570 = vmatpush1.bf16.msra.mxu0 %v548
    %571 = vmatprep.subr.bf16.mxu0 0
    %572 = vmatpush1.bf16.msra.mxu0 %v549
    %573 = vmatprep.subr.bf16.mxu0 0
    %574 = vmatpush1.bf16.msra.mxu0 %v550
    %575 = vmatprep.subr.bf16.mxu0 0
    %576 = vmatpush1.bf16.msra.mxu0 0
    %577 = vmatprep.subr.bf16.mxu0 0
    %578 = vmatpush1.bf16.msra.mxu0 0
    %579 = vmatprep.subr.bf16.mxu0 0
    %580 = vmatpush1.bf16.msra.mxu0 0
    %581 = vmatprep.subr.bf16.mxu0 0
    %582 = vmatpush1.bf16.msra.mxu0 0
    %583 = vmatprep.subr.bf16.mxu0 0
    %584 = vmatpush1.bf16.msra.mxu0 0
    %585 = vmatprep.subr.bf16.mxu0 0
    %586 = vmatpush1.bf16.msra.mxu0 0
    %587 = vmatprep.subr.bf16.mxu0 0
    %588 = vmatpush1.bf16.msra.mxu0 0
    %589 = vmatprep.subr.bf16.mxu0 0
    %590 = vmatpush1.bf16.msra.mxu0 0
    %591 = vmatprep.mubr.bf16.mxu0 0
    %592 = vmatmul.mubr.bf16.gmra.mrb[0].mxu0 %v487
    %v593 = vpop.f32.mrb[0].mxu0
    %v594 = vadd.f32 %v509, %v593
    %v595 = vpop.f32.mrb[0].mxu0
    %v596 = vpop.f32.mrb[0].mxu0
    %v597 = vpop.f32.mrb[0].mxu0
    %598 = vdwg.mxu0
    %v599 = vmax.f32 %v594, 0.0
    %v600 = vld [vmem:[%s4] sm:$0x1]
    %v602 = vlaneseq
    %v603 = vshrl.u32 %v602, 7
    %v604 = vsub.s32 0, %v603
    %v605 = vrot.slane %v600, %v604
    %v607 = vmul.f32 %v599, %v605
    %vm608 = vcmask 1041408
    %v609 = vsel %vm608, %v607, 0.0
    %610 = vadd.xlane.f32.xlu0 %v609
    %v611 = vpop.xlane.xlu0 %610
    %s612 = sld [smem:[#allocation2]]
    %v613 = vstv %s612
    %v614 = vadd.f32 %v611, %v613
    %vm615 = vcmask 1024
    %616 = vst.msk [vmem:[%s6] sm:$0x3] %vm615, %v614
    // Predicated region
    $region30: #{fake_news_detector_forward.1} parent=1 // pred_check
      _
    $region31: #{fake_news_detector_forward.1} parent=1 // pred_check_branch
      %618 = sbr.rel (0) target = $region33
    $region32: #{fake_news_detector_forward.1} parent=1 // pred_region
      _
    $region33: #{fake_news_detector_forward.1} parent=1 // pred_fallthru
      _
    // Predicated region
    $region34: #{fake_news_detector_forward.1} parent=1 // pred_check
      _
    $region35: #{fake_news_detector_forward.1} parent=1 // pred_check_branch
      %620 = sbr.rel (0) target = $region37
    $region36: #{fake_news_detector_forward.1} parent=1 // pred_region
      _
    $region37: #{fake_news_detector_forward.1} parent=1 // pred_fallthru
      _
    %621 = vsyncpa [#allocation4], 1

</llo_original>
